<compile_context>
chip_gen: v7x
topology: tpu7x:2x2x1
jax: 0.10.0
libtpu: 0.0.40
codegen_flags: <defaults>
</compile_context>

<pallas_src>
import functools
import math

import jax
import jax.numpy as jnp
from jax.experimental import pallas as pl
from jax.experimental.pallas import tpu as pltpu

_GELU_C = math.sqrt(2.0 / math.pi)  # Python float literal, not a captured const


def _gelu_new(x):
    # HF/FNet "gelu_new": 0.5 * x * (1 + tanh(sqrt(2/pi) * (x + 0.044715*x^3)))
    return 0.5 * x * (1.0 + jnp.tanh(_GELU_C * (x + 0.044715 * (x * x * x))))


def _transform_tile(x_bf16, w1, b1, gamma, beta, eps):
    """dense -> gelu_new -> LayerNorm for one (tm, H) token tile (f32 math)."""
    h = jnp.dot(x_bf16, w1, preferred_element_type=jnp.float32)  # bf16 MXU, f32 acc
    h = h + b1.astype(jnp.float32)
    h = _gelu_new(h)
    mean = jnp.mean(h, axis=-1, keepdims=True)
    centered = h - mean
    var = jnp.mean(centered * centered, axis=-1, keepdims=True)
    inv = jax.lax.rsqrt(var + eps)                               # eps: Python float
    return centered * inv * gamma.astype(jnp.float32) + beta.astype(jnp.float32)


def _mlm_head_stream_kernel(x_ref, w1_ref, b1_ref, g_ref, beta_ref,
                            w2_ref, b2_ref, out_ref, h_ref, *, eps):
    """Streaming variant. grid = (token tiles i [parallel], vocab tiles j).

    NOTE: the vocab axis MUST stay innermost and sequential ("arbitrary") for
    the pl.when(j == 0) h-scratch reuse to be correct.
    """
    j = pl.program_id(1)

    @pl.when(j == 0)
    def _():
        h = _transform_tile(x_ref[...], w1_ref[...], b1_ref[...],
                            g_ref[...], beta_ref[...], eps)
        h_ref[...] = h.astype(h_ref.dtype)                       # bf16 scratch

    scores = jnp.dot(h_ref[...], w2_ref[...],
                     preferred_element_type=jnp.float32)
    scores = scores + b2_ref[...].astype(jnp.float32)
    out_ref[...] = scores.astype(out_ref.dtype)


def _mlm_head_resident_kernel(x_ref, w1_ref, b1_ref, g_ref, beta_ref,
                              w2_ref, b2_ref, out_ref, h_ref, *, eps, tm):
    """Resident-h variant. grid = (vocab tiles j OUTER, token tiles i INNER).

    h_ref is a (Mp, H) bf16 scratch holding ALL transformed tokens; it is
    filled while j == 0 and reused for every later vocab tile, so each decoder
    weight tile is DMA'd from HBM exactly once.  Requires BOTH grid axes to be
    iterated sequentially ("arbitrary").
    """
    j = pl.program_id(0)
    i = pl.program_id(1)
    off = pl.multiple_of(i * tm, tm)

    @pl.when(j == 0)
    def _():
        h = _transform_tile(x_ref[...], w1_ref[...], b1_ref[...],
                            g_ref[...], beta_ref[...], eps)
        h_ref[pl.ds(off, tm), :] = h.astype(h_ref.dtype)

    scores = jnp.dot(h_ref[pl.ds(off, tm), :], w2_ref[...],
                     preferred_element_type=jnp.float32)
    scores = scores + b2_ref[...].astype(jnp.float32)
    out_ref[...] = scores.astype(out_ref.dtype)


def _round_up(a, b):
    return (a + b - 1) // b * b


def fnet_only_mlm_head(sequence_output, params, *, eps=1e-12, tm=512, tn=512,
                       out_dtype=jnp.bfloat16, resident=None):
    """sequence_output: [B, S, H] -> prediction_scores [B, S, V] (out_dtype)."""
    B, S, H = sequence_output.shape
    V = params["w_dec"].shape[1]
    M = B * S

    # Adaptive, MXU-friendly tiles; large tm amortizes decoder-weight traffic.
    tm = min(tm, _round_up(M, 8))
    tn = min(tn, _round_up(V, 128))
    Mp = _round_up(M, tm)
    Vp = _round_up(V, tn)
    n_i, n_j = Mp // tm, Vp // tn

    # bf16 activations at the kernel boundary: halves x DMA, no in-kernel cast.
    x2d = sequence_output.reshape(M, H).astype(jnp.bfloat16)
    if Mp != M:
        x2d = jnp.pad(x2d, ((0, Mp - M), (0, 0)))

    w_dec, b_dec = params["w_dec"], params["b_dec"]
    if Vp != V:
        w_dec = jnp.pad(w_dec, ((0, 0), (0, Vp - V)))
        b_dec = jnp.pad(b_dec, ((0, 0), (0, Vp - V)))

    w_itemsize = jnp.dtype(params["w_dense"].dtype).itemsize
    out_itemsize = jnp.dtype(out_dtype).itemsize

    # Resident-h gate: whole transformed activation kept in one bf16 VMEM
    # scratch; conservative budget fits v5e/v6e (128 MiB) and v7x (64 MiB).
    resident_scratch_bytes = Mp * H * 2
    if resident is None:
        resident = resident_scratch_bytes <= 16 * 1024 * 1024

    if resident:
        kernel = functools.partial(_mlm_head_resident_kernel,
                                   eps=float(eps), tm=tm)
        grid = (n_j, n_i)                       # vocab OUTER, token INNER
        in_specs = [
            # x is only needed while j == 0; freeze its block index afterwards
            # so it is not re-streamed on every vocab tile.
            pl.BlockSpec((tm, H), lambda j, i: (jnp.where(j == 0, i, 0), 0)),
            pl.BlockSpec((H, H), lambda j, i: (0, 0)),    # dense weight (in,out)
            pl.BlockSpec((1, H), lambda j, i: (0, 0)),    # dense bias
            pl.BlockSpec((1, H), lambda j, i: (0, 0)),    # LN gamma
            pl.BlockSpec((1, H), lambda j, i: (0, 0)),    # LN beta
            pl.BlockSpec((H, tn), lambda j, i: (0, j)),   # decoder weight: 1 pass
            pl.BlockSpec((1, tn), lambda j, i: (0, j)),   # decoder bias tile
        ]
        out_spec = pl.BlockSpec((tm, tn), lambda j, i: (i, j))
        scratch = [pltpu.VMEM((Mp, H), jnp.bfloat16)]
        semantics = ("arbitrary", "arbitrary")  # scratch reuse => sequential grid
        scratch_bytes = resident_scratch_bytes
        dec_weight_passes = 1
    else:
        kernel = functools.partial(_mlm_head_stream_kernel, eps=float(eps))
        grid = (n_i, n_j)                       # token OUTER (parallel), vocab INNER
        in_specs = [
            pl.BlockSpec((tm, H), lambda i, j: (i, 0)),
            pl.BlockSpec((H, H), lambda i, j: (0, 0)),
            pl.BlockSpec((1, H), lambda i, j: (0, 0)),
            pl.BlockSpec((1, H), lambda i, j: (0, 0)),
            pl.BlockSpec((1, H), lambda i, j: (0, 0)),
            pl.BlockSpec((H, tn), lambda i, j: (0, j)),
            pl.BlockSpec((1, tn), lambda i, j: (0, j)),
        ]
        out_spec = pl.BlockSpec((tm, tn), lambda i, j: (i, j))
        scratch = [pltpu.VMEM((tm, H), jnp.bfloat16)]
        semantics = ("parallel", "arbitrary")   # vocab must stay inner+sequential
        scratch_bytes = tm * H * 2
        dec_weight_passes = n_i

    # Explicit VMEM budget (double-buffered tiles + scratch), capped to fit v7x.
    vmem_est = (2 * tm * H * 2                     # x tiles (bf16)
                + 2 * H * H * w_itemsize           # dense weight
                + 2 * H * tn * w_itemsize          # decoder weight tile
                + 2 * tm * tn * out_itemsize       # output tile
                + scratch_bytes
                + 8 * H * 4 + 2 * tn * 4)          # biases / LN params
    vmem_limit = int(min(max(2 * vmem_est, 32 * 1024 * 1024), 64 * 1024 * 1024))

    cost = pl.CostEstimate(
        flops=2 * Mp * H * H + 2 * Mp * H * Vp,
        transcendentals=Mp * H,
        bytes_accessed=(Mp * H * 2                                  # x (bf16)
                        + H * H * w_itemsize + 3 * H * 4            # dense + LN
                        + dec_weight_passes * (H * Vp * w_itemsize + Vp * 4)
                        + Mp * Vp * out_itemsize),                  # logits
    )

    out2d = pl.pallas_call(
        kernel,
        out_shape=jax.ShapeDtypeStruct((Mp, Vp), out_dtype),
        grid_spec=pltpu.PrefetchScalarGridSpec(
            num_scalar_prefetch=0,
            grid=grid,
            in_specs=in_specs,
            out_specs=out_spec,
            scratch_shapes=scratch,
        ),
        compiler_params=pltpu.CompilerParams(
            dimension_semantics=semantics,
            vmem_limit_bytes=vmem_limit),
        cost_estimate=cost,
    )(x2d, params["w_dense"], params["b_dense"], params["ln_gamma"],
      params["ln_beta"], w_dec, b_dec)

    return out2d[:M, :V].reshape(B, S, V)


def init_params(key, hidden_size, vocab_size, *, weight_dtype=jnp.bfloat16):
    k1, k2, k3, k4 = jax.random.split(key, 4)
    scale = 0.02
    return {
        # stored as (in, out) so kernel computes x @ W (== PyTorch x @ W^T)
        "w_dense": (scale * jax.random.normal(
            k1, (hidden_size, hidden_size), jnp.float32)).astype(weight_dtype),
        "b_dense": scale * jax.random.normal(k2, (1, hidden_size), jnp.float32),
        "ln_gamma": jnp.ones((1, hidden_size), jnp.float32),
        "ln_beta": jnp.zeros((1, hidden_size), jnp.float32),
        "w_dec": (scale * jax.random.normal(
            k3, (hidden_size, vocab_size), jnp.float32)).astype(weight_dtype),
        "b_dec": scale * jax.random.normal(k4, (1, vocab_size), jnp.float32),
    }


def _reference(sequence_output, params, eps=1e-12):
    f32 = jnp.float32
    # Mirror the kernel's bf16 matmul inputs / f32 accumulation.
    x = sequence_output.astype(params["w_dense"].dtype).astype(f32)
    h = x @ params["w_dense"].astype(f32) + params["b_dense"][0].astype(f32)
    h = _gelu_new(h)
    mean = jnp.mean(h, axis=-1, keepdims=True)
    var = jnp.mean((h - mean) ** 2, axis=-1, keepdims=True)
    h = ((h - mean) * jax.lax.rsqrt(var + eps) * params["ln_gamma"][0]
         + params["ln_beta"][0])
    h = h.astype(params["w_dec"].dtype).astype(f32)
    return h @ params["w_dec"].astype(f32) + params["b_dec"][0].astype(f32)


if __name__ == "__main__":
    key = jax.random.PRNGKey(0)
    kx1, kp1, kx2, kp2 = jax.random.split(key, 4)

    # ---- Config 1: tiny FNet-like shapes (single-tile grid). ----
    B, S, H, V = 2, 8, 128, 256
    seq_out = jax.random.normal(kx1, (B, S, H), jnp.float32)
    params = init_params(kp1, H, V)
    ref = _reference(seq_out, params)

    for res in (True, False):                      # exercise both kernel variants
        scores = fnet_only_mlm_head(seq_out, params, resident=res)
        scores = jax.block_until_ready(scores)
        assert scores.shape == (B, S, V)
        assert jnp.allclose(scores.astype(jnp.float32), ref,
                            atol=3e-2, rtol=3e-2), f"mismatch (resident={res})"

    # f32-logits path, tighter tolerance.
    scores_f32 = jax.block_until_ready(
        fnet_only_mlm_head(seq_out, params, out_dtype=jnp.float32))
    assert jnp.allclose(scores_f32, ref, atol=1e-2, rtol=1e-2), "f32 mismatch"

    # ---- Config 2: multi-tile grid with padding on token & vocab axes. ----
    B2, S2, H2, V2 = 2, 40, 128, 384               # M=80 -> Mp=96 with tm=32
    seq_out2 = jax.random.normal(kx2, (B2, S2, H2), jnp.float32)
    params2 = init_params(kp2, H2, V2)
    ref2 = _reference(seq_out2, params2)

    for res in (True, False):
        scores2 = fnet_only_mlm_head(seq_out2, params2, tm=32, tn=128,
                                     resident=res)
        scores2 = jax.block_until_ready(scores2)
        assert scores2.shape == (B2, S2, V2)
        assert jnp.allclose(scores2.astype(jnp.float32), ref2,
                            atol=3e-2, rtol=3e-2), f"mismatch-2 (resident={res})"

    print("KERNEL_OK")
</pallas_src>

<mosaic_0001>
module attributes {stable_mosaic.version = 11 : i64} {
  func.func @_mlm_head_resident_kernel(%arg0: i32, %arg1: i32, %arg2: memref<16x128xbf16, #tpu.memory_space<vmem>>, %arg3: memref<128x128xbf16, #tpu.memory_space<vmem>>, %arg4: memref<1x128xf32, #tpu.memory_space<vmem>>, %arg5: memref<1x128xf32, #tpu.memory_space<vmem>>, %arg6: memref<1x128xf32, #tpu.memory_space<vmem>>, %arg7: memref<128x256xbf16, #tpu.memory_space<vmem>>, %arg8: memref<1x256xf32, #tpu.memory_space<vmem>>, %arg9: memref<16x256xbf16, #tpu.memory_space<vmem>>, %arg10: memref<16x128xbf16, #tpu.memory_space<vmem>>) attributes {dimension_semantics = [#tpu.dimension_semantics<arbitrary>, #tpu.dimension_semantics<arbitrary>], iteration_bounds = array<i64: 1, 1>, scalar_prefetch = 0 : i64, scratch_operands = 1 : i64, tpu.core_type = #tpu.core_type<tc>, window_params = [{transform_indices = @transform_0, window_bounds = array<i64: 16, 128>}, {pipeline_mode = #tpu.pipeline_mode<synchronous>, transform_indices = @transform_1, window_bounds = array<i64: 128, 128>}, {pipeline_mode = #tpu.pipeline_mode<synchronous>, transform_indices = @transform_2, window_bounds = array<i64: 1, 128>}, {pipeline_mode = #tpu.pipeline_mode<synchronous>, transform_indices = @transform_3, window_bounds = array<i64: 1, 128>}, {pipeline_mode = #tpu.pipeline_mode<synchronous>, transform_indices = @transform_4, window_bounds = array<i64: 1, 128>}, {transform_indices = @transform_5, window_bounds = array<i64: 128, 256>}, {transform_indices = @transform_6, window_bounds = array<i64: 1, 256>}, {transform_indices = @transform_7, window_bounds = array<i64: 16, 256>}]} {
    %c16_i32 = arith.constant 16 : i32
    %0 = arith.muli %arg1, %c16_i32 : i32
    %1 = tpu.assume_multiple %0, 16 : i32
    %c0_i32 = arith.constant 0 : i32
    %2 = arith.cmpi eq, %arg0, %c0_i32 : i32
    %3 = arith.extui %2 : i1 to i32
    %c0_i32_0 = arith.constant 0 : i32
    %4 = arith.cmpi ne, %3, %c0_i32_0 : i32
    scf.if %4 {
      %c0_7 = arith.constant 0 : index
      %c0_8 = arith.constant 0 : index
      %14 = vector.load %arg2[%c0_7, %c0_8] : memref<16x128xbf16, #tpu.memory_space<vmem>>, vector<16x128xbf16>
      %c0_9 = arith.constant 0 : index
      %c0_10 = arith.constant 0 : index
      %15 = vector.load %arg3[%c0_9, %c0_10] : memref<128x128xbf16, #tpu.memory_space<vmem>>, vector<128x128xbf16>
      %c0_11 = arith.constant 0 : index
      %c0_12 = arith.constant 0 : index
      %16 = vector.load %arg4[%c0_11, %c0_12] : memref<1x128xf32, #tpu.memory_space<vmem>>, vector<1x128xf32>
      %c0_13 = arith.constant 0 : index
      %c0_14 = arith.constant 0 : index
      %17 = vector.load %arg5[%c0_13, %c0_14] : memref<1x128xf32, #tpu.memory_space<vmem>>, vector<1x128xf32>
      %c0_15 = arith.constant 0 : index
      %c0_16 = arith.constant 0 : index
      %18 = vector.load %arg6[%c0_15, %c0_16] : memref<1x128xf32, #tpu.memory_space<vmem>>, vector<1x128xf32>
      %cst_17 = arith.constant dense<0.000000e+00> : vector<16x128xf32>
      %19 = tpu.matmul %14, %15, %cst_17 {dimension_numbers = #tpu.dot_dimension_numbers<[1], [0], [0], [1], [0, 0, 1, 1], [], []>} : vector<16x128xbf16>, vector<128x128xbf16>, vector<16x128xf32> -> vector<16x128xf32>
      %20 = vector.broadcast %16 : vector<1x128xf32> to vector<16x128xf32>
      %21 = arith.addf %19, %20 : vector<16x128xf32>
      %cst_18 = arith.constant 5.000000e-01 : f32
      %22 = vector.broadcast %cst_18 : f32 to vector<16x128xf32>
      %23 = arith.mulf %22, %21 : vector<16x128xf32>
      %24 = arith.mulf %21, %21 : vector<16x128xf32>
      %25 = arith.mulf %24, %21 : vector<16x128xf32>
      %cst_19 = arith.constant 4.471500e-02 : f32
      %26 = vector.broadcast %cst_19 : f32 to vector<16x128xf32>
      %27 = arith.mulf %26, %25 : vector<16x128xf32>
      %28 = arith.addf %21, %27 : vector<16x128xf32>
      %cst_20 = arith.constant 0.797884583 : f32
      %29 = vector.broadcast %cst_20 : f32 to vector<16x128xf32>
      %30 = arith.mulf %29, %28 : vector<16x128xf32>
      %31 = math.tanh %30 : vector<16x128xf32>
      %cst_21 = arith.constant 1.000000e+00 : f32
      %32 = vector.broadcast %cst_21 : f32 to vector<16x128xf32>
      %33 = arith.addf %32, %31 : vector<16x128xf32>
      %34 = arith.mulf %23, %33 : vector<16x128xf32>
      %cst_22 = arith.constant dense<0.000000e+00> : vector<16xf32>
      %35 = vector.multi_reduction <add>, %34, %cst_22 [1] : vector<16x128xf32> to vector<16xf32>
      %36 = vector.shape_cast %35 : vector<16xf32> to vector<16x1xf32>
      %cst_23 = arith.constant 1.280000e+02 : f32
      %37 = vector.broadcast %cst_23 : f32 to vector<16x1xf32>
      %38 = arith.divf %36, %37 : vector<16x1xf32>
      %39 = vector.broadcast %38 : vector<16x1xf32> to vector<16x128xf32>
      %40 = arith.subf %34, %39 : vector<16x128xf32>
      %41 = arith.mulf %40, %40 : vector<16x128xf32>
      %cst_24 = arith.constant dense<0.000000e+00> : vector<16xf32>
      %42 = vector.multi_reduction <add>, %41, %cst_24 [1] : vector<16x128xf32> to vector<16xf32>
      %43 = vector.shape_cast %42 : vector<16xf32> to vector<16x1xf32>
      %cst_25 = arith.constant 1.280000e+02 : f32
      %44 = vector.broadcast %cst_25 : f32 to vector<16x1xf32>
      %45 = arith.divf %43, %44 : vector<16x1xf32>
      %cst_26 = arith.constant 9.99999996E-13 : f32
      %46 = vector.broadcast %cst_26 : f32 to vector<16x1xf32>
      %47 = arith.addf %45, %46 : vector<16x1xf32>
      %48 = math.rsqrt %47 : vector<16x1xf32>
      %49 = vector.broadcast %48 : vector<16x1xf32> to vector<16x128xf32>
      %50 = arith.mulf %40, %49 : vector<16x128xf32>
      %51 = vector.broadcast %17 : vector<1x128xf32> to vector<16x128xf32>
      %52 = arith.mulf %50, %51 : vector<16x128xf32>
      %53 = vector.broadcast %18 : vector<1x128xf32> to vector<16x128xf32>
      %54 = arith.addf %52, %53 : vector<16x128xf32>
      %55 = arith.truncf %54 : vector<16x128xf32> to vector<16x128xbf16>
      %56 = arith.index_cast %1 : i32 to index
      %c0_27 = arith.constant 0 : index
      %57 = vector.load %arg10[%56, %c0_27] : memref<16x128xbf16, #tpu.memory_space<vmem>>, vector<16x128xbf16>
      tpu.vector_store %arg10[%56, %c0_27], %55 {strides = array<i32>} : memref<16x128xbf16, #tpu.memory_space<vmem>>, vector<16x128xbf16>,
    } else {
    }
    %5 = arith.index_cast %1 : i32 to index
    %c0 = arith.constant 0 : index
    %6 = vector.load %arg10[%5, %c0] : memref<16x128xbf16, #tpu.memory_space<vmem>>, vector<16x128xbf16>
    %c0_1 = arith.constant 0 : index
    %c0_2 = arith.constant 0 : index
    %7 = vector.load %arg7[%c0_1, %c0_2] : memref<128x256xbf16, #tpu.memory_space<vmem>>, vector<128x256xbf16>
    %cst = arith.constant dense<0.000000e+00> : vector<16x256xf32>
    %8 = tpu.matmul %6, %7, %cst {dimension_numbers = #tpu.dot_dimension_numbers<[1], [0], [0], [1], [0, 0, 1, 1], [], []>} : vector<16x128xbf16>, vector<128x256xbf16>, vector<16x256xf32> -> vector<16x256xf32>
    %c0_3 = arith.constant 0 : index
    %c0_4 = arith.constant 0 : index
    %9 = vector.load %arg8[%c0_3, %c0_4] : memref<1x256xf32, #tpu.memory_space<vmem>>, vector<1x256xf32>
    %10 = vector.broadcast %9 : vector<1x256xf32> to vector<16x256xf32>
    %11 = arith.addf %8, %10 : vector<16x256xf32>
    %12 = arith.truncf %11 : vector<16x256xf32> to vector<16x256xbf16>
    %c0_5 = arith.constant 0 : index
    %c0_6 = arith.constant 0 : index
    %13 = vector.load %arg9[%c0_5, %c0_6] : memref<16x256xbf16, #tpu.memory_space<vmem>>, vector<16x256xbf16>
    tpu.vector_store %arg9[%c0_5, %c0_6], %12 {strides = array<i32>} : memref<16x256xbf16, #tpu.memory_space<vmem>>, vector<16x256xbf16>,
    return
  }
  func.func @transform_0(%arg0: i32, %arg1: i32) -> (i32, i32) {
    %c0_i32 = arith.constant 0 : i32
    %0 = arith.cmpi eq, %arg0, %c0_i32 : i32
    %c0_i32_0 = arith.constant 0 : i32
    %1 = arith.select %0, %arg1, %c0_i32_0 : i32
    %c0_i32_1 = arith.constant 0 : i32
    %c0_i32_2 = arith.constant 0 : i32
    return %1, %c0_i32_1 : i32, i32
  }
  func.func @transform_1(%arg0: i32, %arg1: i32) -> (i32, i32) {
    %c0_i32 = arith.constant 0 : i32
    %c0_i32_0 = arith.constant 0 : i32
    %c0_i32_1 = arith.constant 0 : i32
    return %c0_i32, %c0_i32_0 : i32, i32
  }
  func.func @transform_2(%arg0: i32, %arg1: i32) -> (i32, i32) {
    %c0_i32 = arith.constant 0 : i32
    %c0_i32_0 = arith.constant 0 : i32
    %c0_i32_1 = arith.constant 0 : i32
    return %c0_i32, %c0_i32_0 : i32, i32
  }
  func.func @transform_3(%arg0: i32, %arg1: i32) -> (i32, i32) {
    %c0_i32 = arith.constant 0 : i32
    %c0_i32_0 = arith.constant 0 : i32
    %c0_i32_1 = arith.constant 0 : i32
    return %c0_i32, %c0_i32_0 : i32, i32
  }
  func.func @transform_4(%arg0: i32, %arg1: i32) -> (i32, i32) {
    %c0_i32 = arith.constant 0 : i32
    %c0_i32_0 = arith.constant 0 : i32
    %c0_i32_1 = arith.constant 0 : i32
    return %c0_i32, %c0_i32_0 : i32, i32
  }
  func.func @transform_5(%arg0: i32, %arg1: i32) -> (i32, i32) {
    %c0_i32 = arith.constant 0 : i32
    %c0_i32_0 = arith.constant 0 : i32
    return %c0_i32, %arg0 : i32, i32
  }
  func.func @transform_6(%arg0: i32, %arg1: i32) -> (i32, i32) {
    %c0_i32 = arith.constant 0 : i32
    %c0_i32_0 = arith.constant 0 : i32
    return %c0_i32, %arg0 : i32, i32
  }
  func.func @transform_7(%arg0: i32, %arg1: i32) -> (i32, i32) {
    %c0_i32 = arith.constant 0 : i32
    return %arg1, %arg0 : i32, i32
  }
}

</mosaic_0001>

<llo_original>
// kernel: tpu_custom_call.1
$region0: #{tpu_custom_call.1}
  #allocation0 [shape = 'u32[]', space=smem, size = 0x4, offset = 0x4, fixed_abs, tag = 'smem constant byte address 0x4 - core index']
  #allocation1 [shape = 'u32[144,128]{1,0:T(1,128)}', space=vmem, size = 0x12000, scoped, tag = 'internal scratch']
  #allocation2 [shape = 'bf16[16,128]{1,0:T(16,128)(2,1)}', space=vmem, size = 0x1000, scoped, tag = 'scratch operand']
  %s0 = inlined_call_operand.hbm [shape: bf16[16,128], index: 0, kind: input, shape index: {}]
  %s1 = inlined_call_operand.hbm [shape: bf16[128,128], index: 1, kind: input, shape index: {}]
  %s2 = inlined_call_operand.vmem [shape: f32[1,128], index: 2, kind: input, shape index: {}]
  %s3 = inlined_call_operand.vmem [shape: f32[1,128], index: 3, kind: input, shape index: {}]
  %s4 = inlined_call_operand.vmem [shape: f32[1,128], index: 4, kind: input, shape index: {}]
  %s5 = inlined_call_operand.hbm [shape: bf16[128,256], index: 5, kind: input, shape index: {}]
  %s6 = inlined_call_operand.vmem [shape: f32[1,256], index: 6, kind: input, shape index: {}]
  %s7 = inlined_call_operand.hbm [shape: bf16[16,256], index: 7, kind: output, shape index: {}]
  %s8 = sld [smem:[#allocation0]]
  $region54: #{tpu_custom_call.1} parent=0
    _
  %s10 = ssub.s32 1, %s8
  %s11 = scalar_select 0, %s10, %s8
  $region1: #{tpu_custom_call.1} parent=0
    #allocation3 [shape = 'u8[4096]{0}', space=vmem, size = 0x1000, scoped, tag = 'input window, operand 0, single buffered']
    #allocation4 [shape = 's32[1]{0}', space=sflag, size = 0x4, scoped, tag = 'scoped memory for tpu_custom_call.1']
    #allocation5 [shape = 's32[1]{0}', space=sflag, size = 0x4, scoped, tag = 'scoped memory for tpu_custom_call.1']
    #allocation6 [shape = 'u8[32768]{0}', space=vmem, size = 0x8000, scoped, tag = 'input window, operand 1, single buffered']
    #allocation7 [shape = 's32[1]{0}', space=sflag, size = 0x4, scoped, tag = 'scoped memory for tpu_custom_call.1']
    #allocation8 [shape = 'u8[65536]{0}', space=vmem, size = 0x10000, scoped, tag = 'input window, operand 5, single buffered']
    #allocation9 [shape = 'u8[8192]{0}', space=vmem, size = 0x2000, scoped, tag = 'output window, operand 0, single buffered']
    %12 = vsyncpa [#allocation4], 0
    %13 = vsyncpa [#allocation7], 0
    %14 = vsyncpa [#allocation5], 0
    // Predicated region
    $region2: #{tpu_custom_call.1} parent=1 // pred_check
      _
    $region3: #{tpu_custom_call.1} parent=1 // pred_check_branch
      %16 = sbr.rel (0) target = $region5
    $region4: #{tpu_custom_call.1} parent=1 // pred_region
      %p17 = scmp.eq.s32.totalorder 0, 0
      %s18 = scalar_select %p17, 0, 0
      %s19 = smul.u32 2, %s18
      %s21 = ssub.s32 128, 128
      %22 = vsyncadd [#allocation4], %s21
      %s23 = smul.addr %s19, 64
      %s24 = scalar_lea.hbm %s0, %s23
      %s25 = sshll.u32 [#allocation3], 4
      %s26 = int_to_ptr.vmem [resolvable:$true] %s25
      %31 = dma.hbm_to_vmem [thread:$0]  %s24, 128, %s26, [#allocation4], 64, 64, 4
    $region5: #{tpu_custom_call.1} parent=1 // pred_fallthru
      _
    // Predicated region
    $region6: #{tpu_custom_call.1} parent=1 // pred_check
      _
    $region7: #{tpu_custom_call.1} parent=1 // pred_check_branch
      %33 = sbr.rel (0) target = $region9
    $region8: #{tpu_custom_call.1} parent=1 // pred_region
      %s35 = ssub.s32 1024, 1024
      %36 = vsyncadd [#allocation7], %s35
      %s37 = sshll.u32 [#allocation6], 4
      %s38 = int_to_ptr.vmem [resolvable:$true] %s37
      %43 = dma.hbm_to_vmem [thread:$0]  %s1, 1024, %s38, [#allocation7], 64, 64, 4
    $region9: #{tpu_custom_call.1} parent=1 // pred_fallthru
      _
    // Predicated region
    $region10: #{tpu_custom_call.1} parent=1 // pred_check
      _
    $region11: #{tpu_custom_call.1} parent=1 // pred_check_branch
      %45 = sbr.rel (0) target = $region13
    $region12: #{tpu_custom_call.1} parent=1 // pred_region
      _
    $region13: #{tpu_custom_call.1} parent=1 // pred_fallthru
      _
    // Predicated region
    $region14: #{tpu_custom_call.1} parent=1 // pred_check
      _
    $region15: #{tpu_custom_call.1} parent=1 // pred_check_branch
      %47 = sbr.rel (0) target = $region17
    $region16: #{tpu_custom_call.1} parent=1 // pred_region
      _
    $region17: #{tpu_custom_call.1} parent=1 // pred_fallthru
      _
    // Predicated region
    $region18: #{tpu_custom_call.1} parent=1 // pred_check
      _
    $region19: #{tpu_custom_call.1} parent=1 // pred_check_branch
      %49 = sbr.rel (0) target = $region21
    $region20: #{tpu_custom_call.1} parent=1 // pred_region
      _
    $region21: #{tpu_custom_call.1} parent=1 // pred_fallthru
      _
    // Predicated region
    $region22: #{tpu_custom_call.1} parent=1 // pred_check
      _
    $region23: #{tpu_custom_call.1} parent=1 // pred_check_branch
      %51 = sbr.rel (0) target = $region25
    $region24: #{tpu_custom_call.1} parent=1 // pred_region
      %s53 = ssub.s32 2048, 2048
      %54 = vsyncadd [#allocation7], %s53
      %s55 = sshll.u32 [#allocation8], 4
      %s56 = int_to_ptr.vmem [resolvable:$true] %s55
      %61 = dma.hbm_to_vmem [thread:$0]  %s5, 2048, %s56, [#allocation7], 128, 128, 8
    $region25: #{tpu_custom_call.1} parent=1 // pred_fallthru
      _
    // Predicated region
    $region26: #{tpu_custom_call.1} parent=1 // pred_check
      _
    $region27: #{tpu_custom_call.1} parent=1 // pred_check_branch
      %63 = sbr.rel (0) target = $region29
    $region28: #{tpu_custom_call.1} parent=1 // pred_region
      _
    $region29: #{tpu_custom_call.1} parent=1 // pred_fallthru
      _
    // Predicated region
    $region30: #{tpu_custom_call.1} parent=1 // pred_check
      _
    $region31: #{tpu_custom_call.1} parent=1 // pred_check_branch
      %65 = sbr.rel (0) target = $region33
    $region32: #{tpu_custom_call.1} parent=1 // pred_region
      %66 = dma.done [#allocation4], 128
    $region33: #{tpu_custom_call.1} parent=1 // pred_fallthru
      _
    // Predicated region
    $region34: #{tpu_custom_call.1} parent=1 // pred_check
      _
    $region35: #{tpu_custom_call.1} parent=1 // pred_check_branch
      %68 = sbr.rel (0) target = $region37
    $region36: #{tpu_custom_call.1} parent=1 // pred_region
      %69 = dma.done [#allocation7], 1024
    $region37: #{tpu_custom_call.1} parent=1 // pred_fallthru
      _
    // Predicated region
    $region38: #{tpu_custom_call.1} parent=1 // pred_check
      _
    $region39: #{tpu_custom_call.1} parent=1 // pred_check_branch
      %71 = sbr.rel (0) target = $region41
    $region40: #{tpu_custom_call.1} parent=1 // pred_region
      %72 = dma.done [#allocation7], 2048
    $region41: #{tpu_custom_call.1} parent=1 // pred_fallthru
      _
    %p73 = scmp.eq.s32.totalorder 0, 0
    %s74 = scalar_select %p73, 0, 0
    %s75 = smul.u32 2, %s74
    %s77 = smul.u32 0, 16
    %p78 = scmp.eq.s32.totalorder 0, 0
    // Predicated region
    $region42: #{tpu_custom_call.1} parent=1 // pred_check
      %p79 = pneg %p78
    $region43: #{tpu_custom_call.1} parent=1 // pred_check_branch
      %81 = sbr.rel (%p79) target = $region45
    $region44: #{tpu_custom_call.1} parent=1 // pred_region
      %v82 = vld [vmem:[#allocation3] sm:$0xf]
      %v83 = vld [vmem:[#allocation3 + $0x4] sm:$0xf]
      %v84 = vld [vmem:[#allocation6] sm:$0xf]
      %v85 = vld [vmem:[#allocation6 + $0x4] sm:$0xf]
      %v86 = vld [vmem:[#allocation6 + $0x8] sm:$0xf]
      %v87 = vld [vmem:[#allocation6 + $0xc] sm:$0xf]
      %v88 = vld [vmem:[#allocation6 + $0x10] sm:$0xf]
      %v89 = vld [vmem:[#allocation6 + $0x14] sm:$0xf]
      %v90 = vld [vmem:[#allocation6 + $0x18] sm:$0xf]
      %v91 = vld [vmem:[#allocation6 + $0x1c] sm:$0xf]
      %v92 = vld [vmem:[#allocation6 + $0x20] sm:$0xf]
      %v93 = vld [vmem:[#allocation6 + $0x24] sm:$0xf]
      %v94 = vld [vmem:[#allocation6 + $0x28] sm:$0xf]
      %v95 = vld [vmem:[#allocation6 + $0x2c] sm:$0xf]
      %v96 = vld [vmem:[#allocation6 + $0x30] sm:$0xf]
      %v97 = vld [vmem:[#allocation6 + $0x34] sm:$0xf]
      %v98 = vld [vmem:[#allocation6 + $0x38] sm:$0xf]
      %v99 = vld [vmem:[#allocation6 + $0x3c] sm:$0xf]
      %v100 = vld [vmem:[%s2] sm:$0x1]
      %v101 = vld [vmem:[%s3] sm:$0x1]
      %v102 = vld [vmem:[%s4] sm:$0x1]
      %v104 = vlaneseq
      %v105 = vshrl.u32 %v104, 7
      %v106 = vsub.s32 0, %v105
      %v107 = vrot.slane %v100, %v106
      %v111 = vunpack.c.l.b16 %v82
      %v112 = vunpack.c.l.b16 %v83
      %v113 = vpack.c.b16 %v112, %v111
      %v131 = vunpack.c.l.b16 %v84
      %v132 = vunpack.c.l.b16 %v85
      %v133 = vunpack.c.l.b16 %v86
      %v134 = vunpack.c.l.b16 %v87
      %v135 = vunpack.c.l.b16 %v88
      %v136 = vunpack.c.l.b16 %v89
      %v137 = vunpack.c.l.b16 %v90
      %v138 = vunpack.c.l.b16 %v91
      %v139 = vunpack.c.l.b16 %v92
      %v140 = vunpack.c.l.b16 %v93
      %v141 = vunpack.c.l.b16 %v94
      %v142 = vunpack.c.l.b16 %v95
      %v143 = vunpack.c.l.b16 %v96
      %v144 = vunpack.c.l.b16 %v97
      %v145 = vunpack.c.l.b16 %v98
      %v146 = vunpack.c.l.b16 %v99
      %v147 = vpack.c.b16 %v132, %v131
      %v148 = vpack.c.b16 %v134, %v133
      %v149 = vpack.c.b16 %v136, %v135
      %v150 = vpack.c.b16 %v138, %v137
      %v151 = vpack.c.b16 %v140, %v139
      %v152 = vpack.c.b16 %v142, %v141
      %v153 = vpack.c.b16 %v144, %v143
      %v154 = vpack.c.b16 %v146, %v145
      %163 = vmatprep.subr.bf16.mxu0 0
      %164 = vmatpush1.bf16.msra.mxu0 %v147
      %165 = vmatprep.subr.bf16.mxu0 0
      %166 = vmatpush1.bf16.msra.mxu0 %v148
      %167 = vmatprep.subr.bf16.mxu0 0
      %168 = vmatpush1.bf16.msra.mxu0 %v149
      %169 = vmatprep.subr.bf16.mxu0 0
      %170 = vmatpush1.bf16.msra.mxu0 %v150
      %171 = vmatprep.subr.bf16.mxu0 0
      %172 = vmatpush1.bf16.msra.mxu0 %v151
      %173 = vmatprep.subr.bf16.mxu0 0
      %174 = vmatpush1.bf16.msra.mxu0 %v152
      %175 = vmatprep.subr.bf16.mxu0 0
      %176 = vmatpush1.bf16.msra.mxu0 %v153
      %177 = vmatprep.subr.bf16.mxu0 0
      %178 = vmatpush1.bf16.msra.mxu0 %v154
      %179 = vmatprep.subr.bf16.mxu0 0
      %180 = vmatpush1.bf16.msra.mxu0 0
      %181 = vmatprep.subr.bf16.mxu0 0
      %182 = vmatpush1.bf16.msra.mxu0 0
      %183 = vmatprep.subr.bf16.mxu0 0
      %184 = vmatpush1.bf16.msra.mxu0 0
      %185 = vmatprep.subr.bf16.mxu0 0
      %186 = vmatpush1.bf16.msra.mxu0 0
      %187 = vmatprep.subr.bf16.mxu0 0
      %188 = vmatpush1.bf16.msra.mxu0 0
      %189 = vmatprep.subr.bf16.mxu0 0
      %190 = vmatpush1.bf16.msra.mxu0 0
      %191 = vmatprep.subr.bf16.mxu0 0
      %192 = vmatpush1.bf16.msra.mxu0 0
      %193 = vmatprep.subr.bf16.mxu0 0
      %194 = vmatpush1.bf16.msra.mxu0 0
      %195 = vmatprep.mubr.bf16.mxu0 0
      %196 = vmatmul.mubr.bf16.gmra.mrb[0].mxu0 %v113
      %v197 = vpop.f32.mrb[0].mxu0
      %v198 = vadd.f32 %v107, %v197
      %v199 = vpop.f32.mrb[0].mxu0
      %v200 = vpop.f32.mrb[0].mxu0
      %v201 = vadd.f32 %v107, %v200
      %v202 = vpop.f32.mrb[0].mxu0
      %203 = vdwg.mxu0
      %v204 = vmul.f32 %v198, 0.5
      %v205 = vmul.f32 %v201, 0.5
      %v206 = vmul.f32 %v198, %v198
      %v207 = vmul.f32 %v201, %v201
      %v208 = vmul.f32 %v206, %v198
      %v209 = vmul.f32 %v207, %v201
      %v210 = vmul.f32 %v208, 0.044715
      %v211 = vmul.f32 %v209, 0.044715
      %v212 = vadd.f32 %v198, %v210
      %v213 = vadd.f32 %v201, %v211
      %v214 = vmul.f32 %v212, 0.7978846
      %v215 = vmul.f32 %v213, 0.7978846
      %v216 = vtanh.pop %v214
      %v217 = vtanh.pop %v215
      %v218 = vadd.f32 %v216, 1.0
      %v219 = vadd.f32 %v217, 1.0
      %v220 = vmul.f32 %v204, %v218
      %v221 = vmul.f32 %v205, %v219
      %222 = vadd.xlane.f32.xlu0 %v220
      %v223 = vpop.xlane.xlu0 %222
      %224 = vadd.xlane.f32.xlu0 %v221
      %v225 = vpop.xlane.xlu0 %224
      %v226 = vrcp.pop 128.0
      %v227 = vmul.f32 %v223, %v226
      %v228 = vmul.f32 %v225, %v226
      %v229 = vsub.f32 %v220, %v227
      %v230 = vsub.f32 %v221, %v228
      %v231 = vmul.f32 %v229, %v229
      %v232 = vmul.f32 %v230, %v230
      %233 = vadd.xlane.f32.xlu0 %v231
      %v234 = vpop.xlane.xlu0 %233
      %235 = vadd.xlane.f32.xlu0 %v232
      %v236 = vpop.xlane.xlu0 %235
      %v237 = vmul.f32 %v234, %v226
      %v238 = vmul.f32 %v236, %v226
      %v239 = vadd.f32 %v237, 1e-12
      %v240 = vadd.f32 %v238, 1e-12
      %v241 = vrsqrt.pop %v239
      %v242 = vrsqrt.pop %v240
      %v243 = vmul.f32 %v229, %v241
      %v244 = vmul.f32 %v230, %v242
      %v246 = vlaneseq
      %v247 = vshrl.u32 %v246, 7
      %v248 = vsub.s32 0, %v247
      %v249 = vrot.slane %v101, %v248
      %v251 = vmul.f32 %v243, %v249
      %v252 = vmul.f32 %v244, %v249
      %v254 = vlaneseq
      %v255 = vshrl.u32 %v254, 7
      %v256 = vsub.s32 0, %v255
      %v257 = vrot.slane %v102, %v256
      %v259 = vadd.f32 %v251, %v257
      %v260 = vadd.f32 %v252, %v257
      %v261 = vpack.c.bf16 %v260, %v259
      %s262 = sshra.s32 %s77, 4
      %s263 = sand.u32 %s77, 15
      %s264 = smul.addr %s262, 8
      %s265 = scalar_lea.vmem [#allocation2], %s264
      %266 = vst [vmem:[%s265] sm:$0xff] %v261
    $region45: #{tpu_custom_call.1} parent=1 // pred_fallthru
      _
    %s267 = sshra.s32 %s77, 4
    %s268 = sand.u32 %s77, 15
    %s269 = smul.addr %s267, 8
    %s270 = scalar_lea.vmem [#allocation2], %s269
    %v271 = vld [vmem:[%s270] sm:$0xff]
    %v272 = vld [vmem:[#allocation8] sm:$0xff]
    %v273 = vld [vmem:[#allocation8 + $0x8] sm:$0xff]
    %v274 = vld [vmem:[#allocation8 + $0x10] sm:$0xff]
    %v275 = vld [vmem:[#allocation8 + $0x18] sm:$0xff]
    %v276 = vld [vmem:[#allocation8 + $0x20] sm:$0xff]
    %v277 = vld [vmem:[#allocation8 + $0x28] sm:$0xff]
    %v278 = vld [vmem:[#allocation8 + $0x30] sm:$0xff]
    %v279 = vld [vmem:[#allocation8 + $0x38] sm:$0xff]
    %v280 = vld [vmem:[#allocation8 + $0x40] sm:$0xff]
    %v281 = vld [vmem:[#allocation8 + $0x48] sm:$0xff]
    %v282 = vld [vmem:[#allocation8 + $0x50] sm:$0xff]
    %v283 = vld [vmem:[#allocation8 + $0x58] sm:$0xff]
    %v284 = vld [vmem:[#allocation8 + $0x60] sm:$0xff]
    %v285 = vld [vmem:[#allocation8 + $0x68] sm:$0xff]
    %v286 = vld [vmem:[#allocation8 + $0x70] sm:$0xff]
    %v287 = vld [vmem:[#allocation8 + $0x78] sm:$0xff]
    %v288 = vld [vmem:[%s6] sm:$0x3]
    %v290 = vlaneseq
    %v291 = vshrl.u32 %v290, 7
    %v292 = vsub.s32 0, %v291
    %v293 = vrot.slane %v288, %v292
    %v294 = vlaneseq
    %v295 = vshrl.u32 %v294, 7
    %v296 = vsub.s32 1, %v295
    %v297 = vrot.slane %v288, %v296
    %v316 = vunpack.c.l.b16 %v272
    %v317 = vunpack.c.h.b16 %v272
    %v318 = vunpack.c.l.b16 %v273
    %v319 = vunpack.c.h.b16 %v273
    %v320 = vunpack.c.l.b16 %v274
    %v321 = vunpack.c.h.b16 %v274
    %v322 = vunpack.c.l.b16 %v275
    %v323 = vunpack.c.h.b16 %v275
    %v324 = vunpack.c.l.b16 %v276
    %v325 = vunpack.c.h.b16 %v276
    %v326 = vunpack.c.l.b16 %v277
    %v327 = vunpack.c.h.b16 %v277
    %v328 = vunpack.c.l.b16 %v278
    %v329 = vunpack.c.h.b16 %v278
    %v330 = vunpack.c.l.b16 %v279
    %v331 = vunpack.c.h.b16 %v279
    %v332 = vunpack.c.l.b16 %v280
    %v333 = vunpack.c.h.b16 %v280
    %v334 = vunpack.c.l.b16 %v281
    %v335 = vunpack.c.h.b16 %v281
    %v336 = vunpack.c.l.b16 %v282
    %v337 = vunpack.c.h.b16 %v282
    %v338 = vunpack.c.l.b16 %v283
    %v339 = vunpack.c.h.b16 %v283
    %v340 = vunpack.c.l.b16 %v284
    %v341 = vunpack.c.h.b16 %v284
    %v342 = vunpack.c.l.b16 %v285
    %v343 = vunpack.c.h.b16 %v285
    %v344 = vunpack.c.l.b16 %v286
    %v345 = vunpack.c.h.b16 %v286
    %v346 = vunpack.c.l.b16 %v287
    %v347 = vunpack.c.h.b16 %v287
    %v348 = vpack.c.b16 %v318, %v316
    %v349 = vpack.c.b16 %v319, %v317
    %v350 = vpack.c.b16 %v322, %v320
    %v351 = vpack.c.b16 %v323, %v321
    %v352 = vpack.c.b16 %v326, %v324
    %v353 = vpack.c.b16 %v327, %v325
    %v354 = vpack.c.b16 %v330, %v328
    %v355 = vpack.c.b16 %v331, %v329
    %v356 = vpack.c.b16 %v334, %v332
    %v357 = vpack.c.b16 %v335, %v333
    %v358 = vpack.c.b16 %v338, %v336
    %v359 = vpack.c.b16 %v339, %v337
    %v360 = vpack.c.b16 %v342, %v340
    %v361 = vpack.c.b16 %v343, %v341
    %v362 = vpack.c.b16 %v346, %v344
    %v363 = vpack.c.b16 %v347, %v345
    %380 = vmatprep.subr.bf16.mxu0 %v349
    %381 = vmatpush1.bf16.msra.mxu0 %v348
    %382 = vmatprep.subr.bf16.mxu0 %v351
    %383 = vmatpush1.bf16.msra.mxu0 %v350
    %384 = vmatprep.subr.bf16.mxu0 %v353
    %385 = vmatpush1.bf16.msra.mxu0 %v352
    %386 = vmatprep.subr.bf16.mxu0 %v355
    %387 = vmatpush1.bf16.msra.mxu0 %v354
    %388 = vmatprep.subr.bf16.mxu0 %v357
    %389 = vmatpush1.bf16.msra.mxu0 %v356
    %390 = vmatprep.subr.bf16.mxu0 %v359
    %391 = vmatpush1.bf16.msra.mxu0 %v358
    %392 = vmatprep.subr.bf16.mxu0 %v361
    %393 = vmatpush1.bf16.msra.mxu0 %v360
    %394 = vmatprep.subr.bf16.mxu0 %v363
    %395 = vmatpush1.bf16.msra.mxu0 %v362
    %396 = vmatprep.subr.bf16.mxu0 0
    %397 = vmatpush1.bf16.msra.mxu0 0
    %398 = vmatprep.subr.bf16.mxu0 0
    %399 = vmatpush1.bf16.msra.mxu0 0
    %400 = vmatprep.subr.bf16.mxu0 0
    %401 = vmatpush1.bf16.msra.mxu0 0
    %402 = vmatprep.subr.bf16.mxu0 0
    %403 = vmatpush1.bf16.msra.mxu0 0
    %404 = vmatprep.subr.bf16.mxu0 0
    %405 = vmatpush1.bf16.msra.mxu0 0
    %406 = vmatprep.subr.bf16.mxu0 0
    %407 = vmatpush1.bf16.msra.mxu0 0
    %408 = vmatprep.subr.bf16.mxu0 0
    %409 = vmatpush1.bf16.msra.mxu0 0
    %410 = vmatprep.subr.bf16.mxu0 0
    %411 = vmatpush1.bf16.msra.mxu0 0
    %412 = vmatprep.mubr.bf16.mxu0 0
    %413 = vmatmul.mubr.bf16.gmra.mrb[0].mxu0 %v271
    %v414 = vpop.f32.mrb[0].mxu0
    %v415 = vadd.f32 %v293, %v414
    %v416 = vpop.f32.mrb[0].mxu0
    %v417 = vadd.f32 %v297, %v416
    %v418 = vpop.f32.mrb[0].mxu0
    %v419 = vadd.f32 %v293, %v418
    %v420 = vpop.f32.mrb[0].mxu0
    %v421 = vadd.f32 %v297, %v420
    %422 = vdwg.mxu0
    %v423 = vpack.c.bf16 %v419, %v415
    %v424 = vpack.c.bf16 %v421, %v417
    %v427 = vunpack.c.l.b16 %v423
    %v428 = vunpack.c.l.b16 %v424
    %v429 = vunpack.c.h.b16 %v423
    %v430 = vunpack.c.h.b16 %v424
    %v431 = vpack.c.b16 %v428, %v427
    %v432 = vpack.c.b16 %v430, %v429
    %435 = vst [vmem:[#allocation9] sm:$0xff] %v431
    %436 = vst [vmem:[#allocation9 + $0x8] sm:$0xff] %v432
    // Predicated region
    $region46: #{tpu_custom_call.1} parent=1 // pred_check
      _
    $region47: #{tpu_custom_call.1} parent=1 // pred_check_branch
      %438 = sbr.rel (0) target = $region49
    $region48: #{tpu_custom_call.1} parent=1 // pred_region
      %s440 = ssub.s32 256, 256
      %441 = vsyncadd [#allocation5], %s440
      %s442 = sshll.u32 [#allocation9], 4
      %s443 = int_to_ptr.vmem [resolvable:$true] %s442
      %448 = dma.vmem_to_hbm [thread:$0]  %s443, 256, %s7, [#allocation5], 128, 128, 8
    $region49: #{tpu_custom_call.1} parent=1 // pred_fallthru
      _
    // Predicated region
    $region50: #{tpu_custom_call.1} parent=1 // pred_check
      _
    $region51: #{tpu_custom_call.1} parent=1 // pred_check_branch
      %450 = sbr.rel (0) target = $region53
    $region52: #{tpu_custom_call.1} parent=1 // pred_region
      %451 = dma.done [#allocation5], 256
    $region53: #{tpu_custom_call.1} parent=1 // pred_fallthru
      _
    %452 = vsyncpa [#allocation4], 1
    %453 = vsyncpa [#allocation7], 1
    %454 = vsyncpa [#allocation5], 1

</llo_original>
